<compile_context>
chip_gen: v7x
topology: tpu7x:2x2x1
jax: 0.10.0
libtpu: 0.0.40
codegen_flags: <defaults>
</compile_context>

<pallas_src>
import math

import jax
import jax.numpy as jnp
from jax import lax
from jax.experimental import pallas as pl
from jax.experimental.pallas import tpu as pltpu

# ---- TVDenoiser defaults (ndim=1) ------------------------------------------------
THS = 0.1                        # self.ths (trainable=False -> plain float)
NITER = 100                      # niter -> _TVDenoiser.n_it_max
CRIT = 1e-5                      # convergence criterion
TAU = 0.01
RHO = 1.99
SIGMA = 1.0 / TAU / 8.0          # 12.5
INV_1P_TAU = 1.0 / (1.0 + TAU)   # precomputed reciprocal (no per-iteration divide)
CLIP = THS / math.sqrt(2.0)      # 2-identical-channel dual prox == clip at ths/sqrt(2)
CHECK_EVERY = 10                 # convergence-check cadence; must divide NITER
CRIT2 = CRIT * CRIT


def _tv_kernel(y_ref, out_ref):
    """Over-relaxed Chambolle-Pock TV prox, fully VMEM-resident.

    y_ref/out_ref: (R, C) f32; C (the lane axis) is the finite-difference axis
    (torch axis=0 of the reshaped tensor).
    """
    y = y_ref[...]
    R, C = y.shape

    # Loop-invariant constants, hoisted once (JAX does not CSE broadcast_in_dim).
    col = lax.broadcasted_iota(jnp.int32, (R, C), 1)
    not_last = col < (C - 1)
    not_first = col >= 1
    tau_y = TAU * y

    def nabla(x):
        # torch nabla1 (diff axis -> lanes): u[c] = x[c+1] - x[c] for c < C-1, else 0.
        x_next = jnp.roll(x, -1, axis=1)
        return jnp.where(not_last, x_next - x, 0.0)

    def nabla_adjoint(v):
        # torch nabla1_adjoint: out[c] = v[c-1]*[c>=1] - v[c]*[c<C-1].
        v_prev = jnp.roll(v, 1, axis=1)
        return jnp.where(not_first, v_prev, 0.0) - jnp.where(not_last, v, 0.0)

    def one_iter(x2, v):
        # x = prox_tau_fx(x2 - tau*D^T v, y) = (x2 - tau*D^T v + tau*y) / (1 + tau)
        x = (x2 - TAU * nabla_adjoint(v) + tau_y) * INV_1P_TAU
        # w = v + sigma*D(2x - x2); dual prox == clip at +-ths/sqrt(2) (see header note)
        w = v + SIGMA * nabla(2.0 * x - x2)
        u = jnp.clip(w, -CLIP, CLIP)
        x2_new = x2 + RHO * (x - x2)
        v_new = v + RHO * (u - v)
        return x2_new, v_new

    def cond(state):
        k, _, _, not_done = state
        return jnp.logical_and(k < NITER, not_done)

    def body(state):
        k, x2, v, _ = state
        # CHECK_EVERY-1 unrolled iterations, then one more carrying the convergence test.
        x2, v = lax.fori_loop(
            0, CHECK_EVERY - 1, lambda _, c: one_iter(*c), (x2, v), unroll=True)
        x_prev = x2
        x2, v = one_iter(x2, v)
        # rel_err < crit  <=>  ||x_prev - x2||^2 < crit^2 * ||x2 + 1e-12||^2   (no sqrt)
        d = x_prev - x2
        num2 = jnp.sum(d * d)
        e = x2 + 1e-12
        den2 = jnp.sum(e * e)
        not_done = num2 >= CRIT2 * den2
        return k + CHECK_EVERY, x2, v, not_done

    state0 = (jnp.array(0, jnp.int32), y, jnp.zeros_like(y), jnp.array(True))
    _, x2_final, _, _ = lax.while_loop(cond, body, state0)
    out_ref[...] = x2_final


@jax.jit
def tv_denoise(x):
    """Pallas equivalent of TVDenoiser(ndim=1).forward(x) for real input (first call)."""
    ishape = x.shape
    y = x.reshape(-1, ishape[-1]).astype(jnp.float32)   # torch: input.reshape(-1, ishape[-1])
    y_t = y.T                                            # (R, C) lane-dense kernel layout
    out_t = pl.pallas_call(
        _tv_kernel,
        out_shape=jax.ShapeDtypeStruct(y_t.shape, y_t.dtype),
        in_specs=[pl.BlockSpec(memory_space=pltpu.MemorySpace.VMEM)],
        out_specs=pl.BlockSpec(memory_space=pltpu.MemorySpace.VMEM),
    )(y_t)
    return out_t.T.reshape(ishape)


# ---- plain-JAX literal translation of the torch code (eager) for a self-check -----
def tv_denoise_ref(x):
    ishape = x.shape
    y = jnp.asarray(x, jnp.float32).reshape(-1, ishape[-1])   # (B, L), diff along axis 0

    def nabla1(v):
        # (B, L) -> (B, L, 1): forward diff along axis 0, last row zero.
        d = v[1:] - v[:-1]
        u = jnp.concatenate([d, jnp.zeros_like(v[:1])], axis=0)
        return u[..., None]

    def nabla1_adjoint(v):
        # (B, L, 2) -> (B, L); torch only reads channel 0 of the dual.
        v0 = v[..., 0]
        u = jnp.zeros_like(v0)
        u = u.at[:-1].add(-v0[:-1])
        u = u.at[1:].add(v0[:-1])
        return u

    x2 = y
    u2 = jnp.zeros((*y.shape, 2), jnp.float32)   # torch: zeros((*x2.shape, 2))
    for it in range(NITER):
        x_prev = x2
        xk = (x2 - TAU * nabla1_adjoint(u2) + TAU * y) / (1.0 + TAU)
        w = u2 + SIGMA * nabla1(2.0 * xk - x2)    # (B,L,1) broadcasts onto both dual channels
        nrm = jnp.sqrt(jnp.sum(w * w, axis=-1))
        uk = w / jnp.maximum(nrm / THS, 1.0)[..., None]
        x2 = x2 + RHO * (xk - x2)
        u2 = u2 + RHO * (uk - u2)
        rel = jnp.linalg.norm((x_prev - x2).ravel()) / jnp.linalg.norm((x2 + 1e-12).ravel())
        if it > 1 and float(rel) < CRIT:
            break
    return x2.reshape(ishape)


if __name__ == "__main__":
    key = jax.random.PRNGKey(0)
    x = jax.random.normal(key, (2, 4, 16, 16), dtype=jnp.float32)

    out = jax.block_until_ready(tv_denoise(x))
    ref = tv_denoise_ref(x)

    assert out.shape == x.shape and out.dtype == jnp.float32
    max_err = float(jnp.max(jnp.abs(out - ref)))
    assert jnp.allclose(out, ref, atol=2e-4, rtol=2e-4), max_err

    print("KERNEL_OK")
</pallas_src>

<mosaic_0001>
module attributes {stable_mosaic.version = 11 : i64} {
  func.func @_tv_kernel(%arg0: memref<16x128xf32, #tpu.memory_space<vmem>>, %arg1: memref<16x128xf32, #tpu.memory_space<vmem>>) attributes {dimension_semantics = [], scalar_prefetch = 0 : i64, scratch_operands = 0 : i64, tpu.core_type = #tpu.core_type<tc>} {
    %c0 = arith.constant 0 : index
    %c0_0 = arith.constant 0 : index
    %0 = vector.load %arg0[%c0, %c0_0] : memref<16x128xf32, #tpu.memory_space<vmem>>, vector<16x128xf32>
    %1 = tpu.iota {dimensions = array<i32: 1>} : vector<16x128xi32>
    %c127_i32 = arith.constant 127 : i32
    %2 = vector.broadcast %c127_i32 : i32 to vector<16x128xi32>
    %3 = arith.cmpi slt, %1, %2 : vector<16x128xi32>
    %c1_i32 = arith.constant 1 : i32
    %4 = vector.broadcast %c1_i32 : i32 to vector<16x128xi32>
    %5 = arith.cmpi sge, %1, %4 : vector<16x128xi32>
    %cst = arith.constant 0.00999999977 : f32
    %6 = vector.broadcast %cst : f32 to vector<16x128xf32>
    %7 = arith.mulf %6, %0 : vector<16x128xf32>
    %cst_1 = arith.constant 0.000000e+00 : f32
    %8 = vector.broadcast %cst_1 : f32 to vector<16x128xf32>
    %c0_i32 = arith.constant 0 : i32
    %true = arith.constant true
    %9:4 = scf.while (%arg2 = %c0_i32, %arg3 = %0, %arg4 = %8, %arg5 = %true) : (i32, vector<16x128xf32>, vector<16x128xf32>, i1) -> (i32, vector<16x128xf32>, vector<16x128xf32>, i1) {
      %c100_i32 = arith.constant 100 : i32
      %11 = arith.cmpi slt, %arg2, %c100_i32 : i32
      %12 = arith.andi %11, %arg5 : i1
      scf.condition(%12) %arg2, %arg3, %arg4, %arg5 : i32, vector<16x128xf32>, vector<16x128xf32>, i1
    } do {
    ^bb0(%arg2: i32, %arg3: vector<16x128xf32>, %arg4: vector<16x128xf32>, %arg5: i1):
      %c0_i32_4 = arith.constant 0 : i32
      %11 = vector.extract_strided_slice %arg4 {offsets = [0, 127], sizes = [16, 1], strides = [1, 1]} : vector<16x128xf32> to vector<16x1xf32>
      %12 = vector.extract_strided_slice %arg4 {offsets = [0, 0], sizes = [16, 127], strides = [1, 1]} : vector<16x128xf32> to vector<16x127xf32>
      %13 = tpu.concatenate %11, %12 in 1 : vector<16x1xf32>, vector<16x127xf32> -> vector<16x128xf32>
      %cst_5 = arith.constant 0.000000e+00 : f32
      %14 = vector.broadcast %cst_5 : f32 to vector<16x128xf32>
      %15 = arith.select %5, %13, %14 : vector<16x128xi1>, vector<16x128xf32>
      %cst_6 = arith.constant 0.000000e+00 : f32
      %16 = vector.broadcast %cst_6 : f32 to vector<16x128xf32>
      %17 = arith.select %3, %arg4, %16 : vector<16x128xi1>, vector<16x128xf32>
      %18 = arith.subf %15, %17 : vector<16x128xf32>
      %cst_7 = arith.constant 0.00999999977 : f32
      %19 = vector.broadcast %cst_7 : f32 to vector<16x128xf32>
      %20 = arith.mulf %19, %18 : vector<16x128xf32>
      %21 = arith.subf %arg3, %20 : vector<16x128xf32>
      %22 = arith.addf %21, %7 : vector<16x128xf32>
      %cst_8 = arith.constant 9.900990e-01 : f32
      %23 = vector.broadcast %cst_8 : f32 to vector<16x128xf32>
      %24 = arith.mulf %22, %23 : vector<16x128xf32>
      %cst_9 = arith.constant 2.000000e+00 : f32
      %25 = vector.broadcast %cst_9 : f32 to vector<16x128xf32>
      %26 = arith.mulf %25, %24 : vector<16x128xf32>
      %27 = arith.subf %26, %arg3 : vector<16x128xf32>
      %28 = vector.extract_strided_slice %27 {offsets = [0, 1], sizes = [16, 127], strides = [1, 1]} : vector<16x128xf32> to vector<16x127xf32>
      %29 = vector.extract_strided_slice %27 {offsets = [0, 0], sizes = [16, 1], strides = [1, 1]} : vector<16x128xf32> to vector<16x1xf32>
      %30 = tpu.concatenate %28, %29 in 1 : vector<16x127xf32>, vector<16x1xf32> -> vector<16x128xf32>
      %31 = arith.subf %30, %27 : vector<16x128xf32>
      %cst_10 = arith.constant 0.000000e+00 : f32
      %32 = vector.broadcast %cst_10 : f32 to vector<16x128xf32>
      %33 = arith.select %3, %31, %32 : vector<16x128xi1>, vector<16x128xf32>
      %cst_11 = arith.constant 1.250000e+01 : f32
      %34 = vector.broadcast %cst_11 : f32 to vector<16x128xf32>
      %35 = arith.mulf %34, %33 : vector<16x128xf32>
      %36 = arith.addf %arg4, %35 : vector<16x128xf32>
      %cst_12 = arith.constant -0.0707106814 : f32
      %cst_13 = arith.constant 0.0707106814 : f32
      %37 = vector.broadcast %cst_12 : f32 to vector<16x128xf32>
      %38 = arith.maximumf %37, %36 : vector<16x128xf32>
      %39 = vector.broadcast %cst_13 : f32 to vector<16x128xf32>
      %40 = arith.minimumf %39, %38 : vector<16x128xf32>
      %41 = arith.subf %24, %arg3 : vector<16x128xf32>
      %cst_14 = arith.constant 1.990000e+00 : f32
      %42 = vector.broadcast %cst_14 : f32 to vector<16x128xf32>
      %43 = arith.mulf %42, %41 : vector<16x128xf32>
      %44 = arith.addf %arg3, %43 : vector<16x128xf32>
      %45 = arith.subf %40, %arg4 : vector<16x128xf32>
      %cst_15 = arith.constant 1.990000e+00 : f32
      %46 = vector.broadcast %cst_15 : f32 to vector<16x128xf32>
      %47 = arith.mulf %46, %45 : vector<16x128xf32>
      %48 = arith.addf %arg4, %47 : vector<16x128xf32>
      %c1_i32_16 = arith.constant 1 : i32
      %49 = vector.extract_strided_slice %48 {offsets = [0, 127], sizes = [16, 1], strides = [1, 1]} : vector<16x128xf32> to vector<16x1xf32>
      %50 = vector.extract_strided_slice %48 {offsets = [0, 0], sizes = [16, 127], strides = [1, 1]} : vector<16x128xf32> to vector<16x127xf32>
      %51 = tpu.concatenate %49, %50 in 1 : vector<16x1xf32>, vector<16x127xf32> -> vector<16x128xf32>
      %cst_17 = arith.constant 0.000000e+00 : f32
      %52 = vector.broadcast %cst_17 : f32 to vector<16x128xf32>
      %53 = arith.select %5, %51, %52 : vector<16x128xi1>, vector<16x128xf32>
      %cst_18 = arith.constant 0.000000e+00 : f32
      %54 = vector.broadcast %cst_18 : f32 to vector<16x128xf32>
      %55 = arith.select %3, %48, %54 : vector<16x128xi1>, vector<16x128xf32>
      %56 = arith.subf %53, %55 : vector<16x128xf32>
      %cst_19 = arith.constant 0.00999999977 : f32
      %57 = vector.broadcast %cst_19 : f32 to vector<16x128xf32>
      %58 = arith.mulf %57, %56 : vector<16x128xf32>
      %59 = arith.subf %44, %58 : vector<16x128xf32>
      %60 = arith.addf %59, %7 : vector<16x128xf32>
      %cst_20 = arith.constant 9.900990e-01 : f32
      %61 = vector.broadcast %cst_20 : f32 to vector<16x128xf32>
      %62 = arith.mulf %60, %61 : vector<16x128xf32>
      %cst_21 = arith.constant 2.000000e+00 : f32
      %63 = vector.broadcast %cst_21 : f32 to vector<16x128xf32>
      %64 = arith.mulf %63, %62 : vector<16x128xf32>
      %65 = arith.subf %64, %44 : vector<16x128xf32>
      %66 = vector.extract_strided_slice %65 {offsets = [0, 1], sizes = [16, 127], strides = [1, 1]} : vector<16x128xf32> to vector<16x127xf32>
      %67 = vector.extract_strided_slice %65 {offsets = [0, 0], sizes = [16, 1], strides = [1, 1]} : vector<16x128xf32> to vector<16x1xf32>
      %68 = tpu.concatenate %66, %67 in 1 : vector<16x127xf32>, vector<16x1xf32> -> vector<16x128xf32>
      %69 = arith.subf %68, %65 : vector<16x128xf32>
      %cst_22 = arith.constant 0.000000e+00 : f32
      %70 = vector.broadcast %cst_22 : f32 to vector<16x128xf32>
      %71 = arith.select %3, %69, %70 : vector<16x128xi1>, vector<16x128xf32>
      %cst_23 = arith.constant 1.250000e+01 : f32
      %72 = vector.broadcast %cst_23 : f32 to vector<16x128xf32>
      %73 = arith.mulf %72, %71 : vector<16x128xf32>
      %74 = arith.addf %48, %73 : vector<16x128xf32>
      %cst_24 = arith.constant -0.0707106814 : f32
      %cst_25 = arith.constant 0.0707106814 : f32
      %75 = vector.broadcast %cst_24 : f32 to vector<16x128xf32>
      %76 = arith.maximumf %75, %74 : vector<16x128xf32>
      %77 = vector.broadcast %cst_25 : f32 to vector<16x128xf32>
      %78 = arith.minimumf %77, %76 : vector<16x128xf32>
      %79 = arith.subf %62, %44 : vector<16x128xf32>
      %cst_26 = arith.constant 1.990000e+00 : f32
      %80 = vector.broadcast %cst_26 : f32 to vector<16x128xf32>
      %81 = arith.mulf %80, %79 : vector<16x128xf32>
      %82 = arith.addf %44, %81 : vector<16x128xf32>
      %83 = arith.subf %78, %48 : vector<16x128xf32>
      %cst_27 = arith.constant 1.990000e+00 : f32
      %84 = vector.broadcast %cst_27 : f32 to vector<16x128xf32>
      %85 = arith.mulf %84, %83 : vector<16x128xf32>
      %86 = arith.addf %48, %85 : vector<16x128xf32>
      %c2_i32 = arith.constant 2 : i32
      %87 = vector.extract_strided_slice %86 {offsets = [0, 127], sizes = [16, 1], strides = [1, 1]} : vector<16x128xf32> to vector<16x1xf32>
      %88 = vector.extract_strided_slice %86 {offsets = [0, 0], sizes = [16, 127], strides = [1, 1]} : vector<16x128xf32> to vector<16x127xf32>
      %89 = tpu.concatenate %87, %88 in 1 : vector<16x1xf32>, vector<16x127xf32> -> vector<16x128xf32>
      %cst_28 = arith.constant 0.000000e+00 : f32
      %90 = vector.broadcast %cst_28 : f32 to vector<16x128xf32>
      %91 = arith.select %5, %89, %90 : vector<16x128xi1>, vector<16x128xf32>
      %cst_29 = arith.constant 0.000000e+00 : f32
      %92 = vector.broadcast %cst_29 : f32 to vector<16x128xf32>
      %93 = arith.select %3, %86, %92 : vector<16x128xi1>, vector<16x128xf32>
      %94 = arith.subf %91, %93 : vector<16x128xf32>
      %cst_30 = arith.constant 0.00999999977 : f32
      %95 = vector.broadcast %cst_30 : f32 to vector<16x128xf32>
      %96 = arith.mulf %95, %94 : vector<16x128xf32>
      %97 = arith.subf %82, %96 : vector<16x128xf32>
      %98 = arith.addf %97, %7 : vector<16x128xf32>
      %cst_31 = arith.constant 9.900990e-01 : f32
      %99 = vector.broadcast %cst_31 : f32 to vector<16x128xf32>
      %100 = arith.mulf %98, %99 : vector<16x128xf32>
      %cst_32 = arith.constant 2.000000e+00 : f32
      %101 = vector.broadcast %cst_32 : f32 to vector<16x128xf32>
      %102 = arith.mulf %101, %100 : vector<16x128xf32>
      %103 = arith.subf %102, %82 : vector<16x128xf32>
      %104 = vector.extract_strided_slice %103 {offsets = [0, 1], sizes = [16, 127], strides = [1, 1]} : vector<16x128xf32> to vector<16x127xf32>
      %105 = vector.extract_strided_slice %103 {offsets = [0, 0], sizes = [16, 1], strides = [1, 1]} : vector<16x128xf32> to vector<16x1xf32>
      %106 = tpu.concatenate %104, %105 in 1 : vector<16x127xf32>, vector<16x1xf32> -> vector<16x128xf32>
      %107 = arith.subf %106, %103 : vector<16x128xf32>
      %cst_33 = arith.constant 0.000000e+00 : f32
      %108 = vector.broadcast %cst_33 : f32 to vector<16x128xf32>
      %109 = arith.select %3, %107, %108 : vector<16x128xi1>, vector<16x128xf32>
      %cst_34 = arith.constant 1.250000e+01 : f32
      %110 = vector.broadcast %cst_34 : f32 to vector<16x128xf32>
      %111 = arith.mulf %110, %109 : vector<16x128xf32>
      %112 = arith.addf %86, %111 : vector<16x128xf32>
      %cst_35 = arith.constant -0.0707106814 : f32
      %cst_36 = arith.constant 0.0707106814 : f32
      %113 = vector.broadcast %cst_35 : f32 to vector<16x128xf32>
      %114 = arith.maximumf %113, %112 : vector<16x128xf32>
      %115 = vector.broadcast %cst_36 : f32 to vector<16x128xf32>
      %116 = arith.minimumf %115, %114 : vector<16x128xf32>
      %117 = arith.subf %100, %82 : vector<16x128xf32>
      %cst_37 = arith.constant 1.990000e+00 : f32
      %118 = vector.broadcast %cst_37 : f32 to vector<16x128xf32>
      %119 = arith.mulf %118, %117 : vector<16x128xf32>
      %120 = arith.addf %82, %119 : vector<16x128xf32>
      %121 = arith.subf %116, %86 : vector<16x128xf32>
      %cst_38 = arith.constant 1.990000e+00 : f32
      %122 = vector.broadcast %cst_38 : f32 to vector<16x128xf32>
      %123 = arith.mulf %122, %121 : vector<16x128xf32>
      %124 = arith.addf %86, %123 : vector<16x128xf32>
      %c3_i32 = arith.constant 3 : i32
      %125 = vector.extract_strided_slice %124 {offsets = [0, 127], sizes = [16, 1], strides = [1, 1]} : vector<16x128xf32> to vector<16x1xf32>
      %126 = vector.extract_strided_slice %124 {offsets = [0, 0], sizes = [16, 127], strides = [1, 1]} : vector<16x128xf32> to vector<16x127xf32>
      %127 = tpu.concatenate %125, %126 in 1 : vector<16x1xf32>, vector<16x127xf32> -> vector<16x128xf32>
      %cst_39 = arith.constant 0.000000e+00 : f32
      %128 = vector.broadcast %cst_39 : f32 to vector<16x128xf32>
      %129 = arith.select %5, %127, %128 : vector<16x128xi1>, vector<16x128xf32>
      %cst_40 = arith.constant 0.000000e+00 : f32
      %130 = vector.broadcast %cst_40 : f32 to vector<16x128xf32>
      %131 = arith.select %3, %124, %130 : vector<16x128xi1>, vector<16x128xf32>
      %132 = arith.subf %129, %131 : vector<16x128xf32>
      %cst_41 = arith.constant 0.00999999977 : f32
      %133 = vector.broadcast %cst_41 : f32 to vector<16x128xf32>
      %134 = arith.mulf %133, %132 : vector<16x128xf32>
      %135 = arith.subf %120, %134 : vector<16x128xf32>
      %136 = arith.addf %135, %7 : vector<16x128xf32>
      %cst_42 = arith.constant 9.900990e-01 : f32
      %137 = vector.broadcast %cst_42 : f32 to vector<16x128xf32>
      %138 = arith.mulf %136, %137 : vector<16x128xf32>
      %cst_43 = arith.constant 2.000000e+00 : f32
      %139 = vector.broadcast %cst_43 : f32 to vector<16x128xf32>
      %140 = arith.mulf %139, %138 : vector<16x128xf32>
      %141 = arith.subf %140, %120 : vector<16x128xf32>
      %142 = vector.extract_strided_slice %141 {offsets = [0, 1], sizes = [16, 127], strides = [1, 1]} : vector<16x128xf32> to vector<16x127xf32>
      %143 = vector.extract_strided_slice %141 {offsets = [0, 0], sizes = [16, 1], strides = [1, 1]} : vector<16x128xf32> to vector<16x1xf32>
      %144 = tpu.concatenate %142, %143 in 1 : vector<16x127xf32>, vector<16x1xf32> -> vector<16x128xf32>
      %145 = arith.subf %144, %141 : vector<16x128xf32>
      %cst_44 = arith.constant 0.000000e+00 : f32
      %146 = vector.broadcast %cst_44 : f32 to vector<16x128xf32>
      %147 = arith.select %3, %145, %146 : vector<16x128xi1>, vector<16x128xf32>
      %cst_45 = arith.constant 1.250000e+01 : f32
      %148 = vector.broadcast %cst_45 : f32 to vector<16x128xf32>
      %149 = arith.mulf %148, %147 : vector<16x128xf32>
      %150 = arith.addf %124, %149 : vector<16x128xf32>
      %cst_46 = arith.constant -0.0707106814 : f32
      %cst_47 = arith.constant 0.0707106814 : f32
      %151 = vector.broadcast %cst_46 : f32 to vector<16x128xf32>
      %152 = arith.maximumf %151, %150 : vector<16x128xf32>
      %153 = vector.broadcast %cst_47 : f32 to vector<16x128xf32>
      %154 = arith.minimumf %153, %152 : vector<16x128xf32>
      %155 = arith.subf %138, %120 : vector<16x128xf32>
      %cst_48 = arith.constant 1.990000e+00 : f32
      %156 = vector.broadcast %cst_48 : f32 to vector<16x128xf32>
      %157 = arith.mulf %156, %155 : vector<16x128xf32>
      %158 = arith.addf %120, %157 : vector<16x128xf32>
      %159 = arith.subf %154, %124 : vector<16x128xf32>
      %cst_49 = arith.constant 1.990000e+00 : f32
      %160 = vector.broadcast %cst_49 : f32 to vector<16x128xf32>
      %161 = arith.mulf %160, %159 : vector<16x128xf32>
      %162 = arith.addf %124, %161 : vector<16x128xf32>
      %c4_i32 = arith.constant 4 : i32
      %163 = vector.extract_strided_slice %162 {offsets = [0, 127], sizes = [16, 1], strides = [1, 1]} : vector<16x128xf32> to vector<16x1xf32>
      %164 = vector.extract_strided_slice %162 {offsets = [0, 0], sizes = [16, 127], strides = [1, 1]} : vector<16x128xf32> to vector<16x127xf32>
      %165 = tpu.concatenate %163, %164 in 1 : vector<16x1xf32>, vector<16x127xf32> -> vector<16x128xf32>
      %cst_50 = arith.constant 0.000000e+00 : f32
      %166 = vector.broadcast %cst_50 : f32 to vector<16x128xf32>
      %167 = arith.select %5, %165, %166 : vector<16x128xi1>, vector<16x128xf32>
      %cst_51 = arith.constant 0.000000e+00 : f32
      %168 = vector.broadcast %cst_51 : f32 to vector<16x128xf32>
      %169 = arith.select %3, %162, %168 : vector<16x128xi1>, vector<16x128xf32>
      %170 = arith.subf %167, %169 : vector<16x128xf32>
      %cst_52 = arith.constant 0.00999999977 : f32
      %171 = vector.broadcast %cst_52 : f32 to vector<16x128xf32>
      %172 = arith.mulf %171, %170 : vector<16x128xf32>
      %173 = arith.subf %158, %172 : vector<16x128xf32>
      %174 = arith.addf %173, %7 : vector<16x128xf32>
      %cst_53 = arith.constant 9.900990e-01 : f32
      %175 = vector.broadcast %cst_53 : f32 to vector<16x128xf32>
      %176 = arith.mulf %174, %175 : vector<16x128xf32>
      %cst_54 = arith.constant 2.000000e+00 : f32
      %177 = vector.broadcast %cst_54 : f32 to vector<16x128xf32>
      %178 = arith.mulf %177, %176 : vector<16x128xf32>
      %179 = arith.subf %178, %158 : vector<16x128xf32>
      %180 = vector.extract_strided_slice %179 {offsets = [0, 1], sizes = [16, 127], strides = [1, 1]} : vector<16x128xf32> to vector<16x127xf32>
      %181 = vector.extract_strided_slice %179 {offsets = [0, 0], sizes = [16, 1], strides = [1, 1]} : vector<16x128xf32> to vector<16x1xf32>
      %182 = tpu.concatenate %180, %181 in 1 : vector<16x127xf32>, vector<16x1xf32> -> vector<16x128xf32>
      %183 = arith.subf %182, %179 : vector<16x128xf32>
      %cst_55 = arith.constant 0.000000e+00 : f32
      %184 = vector.broadcast %cst_55 : f32 to vector<16x128xf32>
      %185 = arith.select %3, %183, %184 : vector<16x128xi1>, vector<16x128xf32>
      %cst_56 = arith.constant 1.250000e+01 : f32
      %186 = vector.broadcast %cst_56 : f32 to vector<16x128xf32>
      %187 = arith.mulf %186, %185 : vector<16x128xf32>
      %188 = arith.addf %162, %187 : vector<16x128xf32>
      %cst_57 = arith.constant -0.0707106814 : f32
      %cst_58 = arith.constant 0.0707106814 : f32
      %189 = vector.broadcast %cst_57 : f32 to vector<16x128xf32>
      %190 = arith.maximumf %189, %188 : vector<16x128xf32>
      %191 = vector.broadcast %cst_58 : f32 to vector<16x128xf32>
      %192 = arith.minimumf %191, %190 : vector<16x128xf32>
      %193 = arith.subf %176, %158 : vector<16x128xf32>
      %cst_59 = arith.constant 1.990000e+00 : f32
      %194 = vector.broadcast %cst_59 : f32 to vector<16x128xf32>
      %195 = arith.mulf %194, %193 : vector<16x128xf32>
      %196 = arith.addf %158, %195 : vector<16x128xf32>
      %197 = arith.subf %192, %162 : vector<16x128xf32>
      %cst_60 = arith.constant 1.990000e+00 : f32
      %198 = vector.broadcast %cst_60 : f32 to vector<16x128xf32>
      %199 = arith.mulf %198, %197 : vector<16x128xf32>
      %200 = arith.addf %162, %199 : vector<16x128xf32>
      %c5_i32 = arith.constant 5 : i32
      %201 = vector.extract_strided_slice %200 {offsets = [0, 127], sizes = [16, 1], strides = [1, 1]} : vector<16x128xf32> to vector<16x1xf32>
      %202 = vector.extract_strided_slice %200 {offsets = [0, 0], sizes = [16, 127], strides = [1, 1]} : vector<16x128xf32> to vector<16x127xf32>
      %203 = tpu.concatenate %201, %202 in 1 : vector<16x1xf32>, vector<16x127xf32> -> vector<16x128xf32>
      %cst_61 = arith.constant 0.000000e+00 : f32
      %204 = vector.broadcast %cst_61 : f32 to vector<16x128xf32>
      %205 = arith.select %5, %203, %204 : vector<16x128xi1>, vector<16x128xf32>
      %cst_62 = arith.constant 0.000000e+00 : f32
      %206 = vector.broadcast %cst_62 : f32 to vector<16x128xf32>
      %207 = arith.select %3, %200, %206 : vector<16x128xi1>, vector<16x128xf32>
      %208 = arith.subf %205, %207 : vector<16x128xf32>
      %cst_63 = arith.constant 0.00999999977 : f32
      %209 = vector.broadcast %cst_63 : f32 to vector<16x128xf32>
      %210 = arith.mulf %209, %208 : vector<16x128xf32>
      %211 = arith.subf %196, %210 : vector<16x128xf32>
      %212 = arith.addf %211, %7 : vector<16x128xf32>
      %cst_64 = arith.constant 9.900990e-01 : f32
      %213 = vector.broadcast %cst_64 : f32 to vector<16x128xf32>
      %214 = arith.mulf %212, %213 : vector<16x128xf32>
      %cst_65 = arith.constant 2.000000e+00 : f32
      %215 = vector.broadcast %cst_65 : f32 to vector<16x128xf32>
      %216 = arith.mulf %215, %214 : vector<16x128xf32>
      %217 = arith.subf %216, %196 : vector<16x128xf32>
      %218 = vector.extract_strided_slice %217 {offsets = [0, 1], sizes = [16, 127], strides = [1, 1]} : vector<16x128xf32> to vector<16x127xf32>
      %219 = vector.extract_strided_slice %217 {offsets = [0, 0], sizes = [16, 1], strides = [1, 1]} : vector<16x128xf32> to vector<16x1xf32>
      %220 = tpu.concatenate %218, %219 in 1 : vector<16x127xf32>, vector<16x1xf32> -> vector<16x128xf32>
      %221 = arith.subf %220, %217 : vector<16x128xf32>
      %cst_66 = arith.constant 0.000000e+00 : f32
      %222 = vector.broadcast %cst_66 : f32 to vector<16x128xf32>
      %223 = arith.select %3, %221, %222 : vector<16x128xi1>, vector<16x128xf32>
      %cst_67 = arith.constant 1.250000e+01 : f32
      %224 = vector.broadcast %cst_67 : f32 to vector<16x128xf32>
      %225 = arith.mulf %224, %223 : vector<16x128xf32>
      %226 = arith.addf %200, %225 : vector<16x128xf32>
      %cst_68 = arith.constant -0.0707106814 : f32
      %cst_69 = arith.constant 0.0707106814 : f32
      %227 = vector.broadcast %cst_68 : f32 to vector<16x128xf32>
      %228 = arith.maximumf %227, %226 : vector<16x128xf32>
      %229 = vector.broadcast %cst_69 : f32 to vector<16x128xf32>
      %230 = arith.minimumf %229, %228 : vector<16x128xf32>
      %231 = arith.subf %214, %196 : vector<16x128xf32>
      %cst_70 = arith.constant 1.990000e+00 : f32
      %232 = vector.broadcast %cst_70 : f32 to vector<16x128xf32>
      %233 = arith.mulf %232, %231 : vector<16x128xf32>
      %234 = arith.addf %196, %233 : vector<16x128xf32>
      %235 = arith.subf %230, %200 : vector<16x128xf32>
      %cst_71 = arith.constant 1.990000e+00 : f32
      %236 = vector.broadcast %cst_71 : f32 to vector<16x128xf32>
      %237 = arith.mulf %236, %235 : vector<16x128xf32>
      %238 = arith.addf %200, %237 : vector<16x128xf32>
      %c6_i32 = arith.constant 6 : i32
      %239 = vector.extract_strided_slice %238 {offsets = [0, 127], sizes = [16, 1], strides = [1, 1]} : vector<16x128xf32> to vector<16x1xf32>
      %240 = vector.extract_strided_slice %238 {offsets = [0, 0], sizes = [16, 127], strides = [1, 1]} : vector<16x128xf32> to vector<16x127xf32>
      %241 = tpu.concatenate %239, %240 in 1 : vector<16x1xf32>, vector<16x127xf32> -> vector<16x128xf32>
      %cst_72 = arith.constant 0.000000e+00 : f32
      %242 = vector.broadcast %cst_72 : f32 to vector<16x128xf32>
      %243 = arith.select %5, %241, %242 : vector<16x128xi1>, vector<16x128xf32>
      %cst_73 = arith.constant 0.000000e+00 : f32
      %244 = vector.broadcast %cst_73 : f32 to vector<16x128xf32>
      %245 = arith.select %3, %238, %244 : vector<16x128xi1>, vector<16x128xf32>
      %246 = arith.subf %243, %245 : vector<16x128xf32>
      %cst_74 = arith.constant 0.00999999977 : f32
      %247 = vector.broadcast %cst_74 : f32 to vector<16x128xf32>
      %248 = arith.mulf %247, %246 : vector<16x128xf32>
      %249 = arith.subf %234, %248 : vector<16x128xf32>
      %250 = arith.addf %249, %7 : vector<16x128xf32>
      %cst_75 = arith.constant 9.900990e-01 : f32
      %251 = vector.broadcast %cst_75 : f32 to vector<16x128xf32>
      %252 = arith.mulf %250, %251 : vector<16x128xf32>
      %cst_76 = arith.constant 2.000000e+00 : f32
      %253 = vector.broadcast %cst_76 : f32 to vector<16x128xf32>
      %254 = arith.mulf %253, %252 : vector<16x128xf32>
      %255 = arith.subf %254, %234 : vector<16x128xf32>
      %256 = vector.extract_strided_slice %255 {offsets = [0, 1], sizes = [16, 127], strides = [1, 1]} : vector<16x128xf32> to vector<16x127xf32>
      %257 = vector.extract_strided_slice %255 {offsets = [0, 0], sizes = [16, 1], strides = [1, 1]} : vector<16x128xf32> to vector<16x1xf32>
      %258 = tpu.concatenate %256, %257 in 1 : vector<16x127xf32>, vector<16x1xf32> -> vector<16x128xf32>
      %259 = arith.subf %258, %255 : vector<16x128xf32>
      %cst_77 = arith.constant 0.000000e+00 : f32
      %260 = vector.broadcast %cst_77 : f32 to vector<16x128xf32>
      %261 = arith.select %3, %259, %260 : vector<16x128xi1>, vector<16x128xf32>
      %cst_78 = arith.constant 1.250000e+01 : f32
      %262 = vector.broadcast %cst_78 : f32 to vector<16x128xf32>
      %263 = arith.mulf %262, %261 : vector<16x128xf32>
      %264 = arith.addf %238, %263 : vector<16x128xf32>
      %cst_79 = arith.constant -0.0707106814 : f32
      %cst_80 = arith.constant 0.0707106814 : f32
      %265 = vector.broadcast %cst_79 : f32 to vector<16x128xf32>
      %266 = arith.maximumf %265, %264 : vector<16x128xf32>
      %267 = vector.broadcast %cst_80 : f32 to vector<16x128xf32>
      %268 = arith.minimumf %267, %266 : vector<16x128xf32>
      %269 = arith.subf %252, %234 : vector<16x128xf32>
      %cst_81 = arith.constant 1.990000e+00 : f32
      %270 = vector.broadcast %cst_81 : f32 to vector<16x128xf32>
      %271 = arith.mulf %270, %269 : vector<16x128xf32>
      %272 = arith.addf %234, %271 : vector<16x128xf32>
      %273 = arith.subf %268, %238 : vector<16x128xf32>
      %cst_82 = arith.constant 1.990000e+00 : f32
      %274 = vector.broadcast %cst_82 : f32 to vector<16x128xf32>
      %275 = arith.mulf %274, %273 : vector<16x128xf32>
      %276 = arith.addf %238, %275 : vector<16x128xf32>
      %c7_i32 = arith.constant 7 : i32
      %277 = vector.extract_strided_slice %276 {offsets = [0, 127], sizes = [16, 1], strides = [1, 1]} : vector<16x128xf32> to vector<16x1xf32>
      %278 = vector.extract_strided_slice %276 {offsets = [0, 0], sizes = [16, 127], strides = [1, 1]} : vector<16x128xf32> to vector<16x127xf32>
      %279 = tpu.concatenate %277, %278 in 1 : vector<16x1xf32>, vector<16x127xf32> -> vector<16x128xf32>
      %cst_83 = arith.constant 0.000000e+00 : f32
      %280 = vector.broadcast %cst_83 : f32 to vector<16x128xf32>
      %281 = arith.select %5, %279, %280 : vector<16x128xi1>, vector<16x128xf32>
      %cst_84 = arith.constant 0.000000e+00 : f32
      %282 = vector.broadcast %cst_84 : f32 to vector<16x128xf32>
      %283 = arith.select %3, %276, %282 : vector<16x128xi1>, vector<16x128xf32>
      %284 = arith.subf %281, %283 : vector<16x128xf32>
      %cst_85 = arith.constant 0.00999999977 : f32
      %285 = vector.broadcast %cst_85 : f32 to vector<16x128xf32>
      %286 = arith.mulf %285, %284 : vector<16x128xf32>
      %287 = arith.subf %272, %286 : vector<16x128xf32>
      %288 = arith.addf %287, %7 : vector<16x128xf32>
      %cst_86 = arith.constant 9.900990e-01 : f32
      %289 = vector.broadcast %cst_86 : f32 to vector<16x128xf32>
      %290 = arith.mulf %288, %289 : vector<16x128xf32>
      %cst_87 = arith.constant 2.000000e+00 : f32
      %291 = vector.broadcast %cst_87 : f32 to vector<16x128xf32>
      %292 = arith.mulf %291, %290 : vector<16x128xf32>
      %293 = arith.subf %292, %272 : vector<16x128xf32>
      %294 = vector.extract_strided_slice %293 {offsets = [0, 1], sizes = [16, 127], strides = [1, 1]} : vector<16x128xf32> to vector<16x127xf32>
      %295 = vector.extract_strided_slice %293 {offsets = [0, 0], sizes = [16, 1], strides = [1, 1]} : vector<16x128xf32> to vector<16x1xf32>
      %296 = tpu.concatenate %294, %295 in 1 : vector<16x127xf32>, vector<16x1xf32> -> vector<16x128xf32>
      %297 = arith.subf %296, %293 : vector<16x128xf32>
      %cst_88 = arith.constant 0.000000e+00 : f32
      %298 = vector.broadcast %cst_88 : f32 to vector<16x128xf32>
      %299 = arith.select %3, %297, %298 : vector<16x128xi1>, vector<16x128xf32>
      %cst_89 = arith.constant 1.250000e+01 : f32
      %300 = vector.broadcast %cst_89 : f32 to vector<16x128xf32>
      %301 = arith.mulf %300, %299 : vector<16x128xf32>
      %302 = arith.addf %276, %301 : vector<16x128xf32>
      %cst_90 = arith.constant -0.0707106814 : f32
      %cst_91 = arith.constant 0.0707106814 : f32
      %303 = vector.broadcast %cst_90 : f32 to vector<16x128xf32>
      %304 = arith.maximumf %303, %302 : vector<16x128xf32>
      %305 = vector.broadcast %cst_91 : f32 to vector<16x128xf32>
      %306 = arith.minimumf %305, %304 : vector<16x128xf32>
      %307 = arith.subf %290, %272 : vector<16x128xf32>
      %cst_92 = arith.constant 1.990000e+00 : f32
      %308 = vector.broadcast %cst_92 : f32 to vector<16x128xf32>
      %309 = arith.mulf %308, %307 : vector<16x128xf32>
      %310 = arith.addf %272, %309 : vector<16x128xf32>
      %311 = arith.subf %306, %276 : vector<16x128xf32>
      %cst_93 = arith.constant 1.990000e+00 : f32
      %312 = vector.broadcast %cst_93 : f32 to vector<16x128xf32>
      %313 = arith.mulf %312, %311 : vector<16x128xf32>
      %314 = arith.addf %276, %313 : vector<16x128xf32>
      %c8_i32 = arith.constant 8 : i32
      %315 = vector.extract_strided_slice %314 {offsets = [0, 127], sizes = [16, 1], strides = [1, 1]} : vector<16x128xf32> to vector<16x1xf32>
      %316 = vector.extract_strided_slice %314 {offsets = [0, 0], sizes = [16, 127], strides = [1, 1]} : vector<16x128xf32> to vector<16x127xf32>
      %317 = tpu.concatenate %315, %316 in 1 : vector<16x1xf32>, vector<16x127xf32> -> vector<16x128xf32>
      %cst_94 = arith.constant 0.000000e+00 : f32
      %318 = vector.broadcast %cst_94 : f32 to vector<16x128xf32>
      %319 = arith.select %5, %317, %318 : vector<16x128xi1>, vector<16x128xf32>
      %cst_95 = arith.constant 0.000000e+00 : f32
      %320 = vector.broadcast %cst_95 : f32 to vector<16x128xf32>
      %321 = arith.select %3, %314, %320 : vector<16x128xi1>, vector<16x128xf32>
      %322 = arith.subf %319, %321 : vector<16x128xf32>
      %cst_96 = arith.constant 0.00999999977 : f32
      %323 = vector.broadcast %cst_96 : f32 to vector<16x128xf32>
      %324 = arith.mulf %323, %322 : vector<16x128xf32>
      %325 = arith.subf %310, %324 : vector<16x128xf32>
      %326 = arith.addf %325, %7 : vector<16x128xf32>
      %cst_97 = arith.constant 9.900990e-01 : f32
      %327 = vector.broadcast %cst_97 : f32 to vector<16x128xf32>
      %328 = arith.mulf %326, %327 : vector<16x128xf32>
      %cst_98 = arith.constant 2.000000e+00 : f32
      %329 = vector.broadcast %cst_98 : f32 to vector<16x128xf32>
      %330 = arith.mulf %329, %328 : vector<16x128xf32>
      %331 = arith.subf %330, %310 : vector<16x128xf32>
      %332 = vector.extract_strided_slice %331 {offsets = [0, 1], sizes = [16, 127], strides = [1, 1]} : vector<16x128xf32> to vector<16x127xf32>
      %333 = vector.extract_strided_slice %331 {offsets = [0, 0], sizes = [16, 1], strides = [1, 1]} : vector<16x128xf32> to vector<16x1xf32>
      %334 = tpu.concatenate %332, %333 in 1 : vector<16x127xf32>, vector<16x1xf32> -> vector<16x128xf32>
      %335 = arith.subf %334, %331 : vector<16x128xf32>
      %cst_99 = arith.constant 0.000000e+00 : f32
      %336 = vector.broadcast %cst_99 : f32 to vector<16x128xf32>
      %337 = arith.select %3, %335, %336 : vector<16x128xi1>, vector<16x128xf32>
      %cst_100 = arith.constant 1.250000e+01 : f32
      %338 = vector.broadcast %cst_100 : f32 to vector<16x128xf32>
      %339 = arith.mulf %338, %337 : vector<16x128xf32>
      %340 = arith.addf %314, %339 : vector<16x128xf32>
      %cst_101 = arith.constant -0.0707106814 : f32
      %cst_102 = arith.constant 0.0707106814 : f32
      %341 = vector.broadcast %cst_101 : f32 to vector<16x128xf32>
      %342 = arith.maximumf %341, %340 : vector<16x128xf32>
      %343 = vector.broadcast %cst_102 : f32 to vector<16x128xf32>
      %344 = arith.minimumf %343, %342 : vector<16x128xf32>
      %345 = arith.subf %328, %310 : vector<16x128xf32>
      %cst_103 = arith.constant 1.990000e+00 : f32
      %346 = vector.broadcast %cst_103 : f32 to vector<16x128xf32>
      %347 = arith.mulf %346, %345 : vector<16x128xf32>
      %348 = arith.addf %310, %347 : vector<16x128xf32>
      %349 = arith.subf %344, %314 : vector<16x128xf32>
      %cst_104 = arith.constant 1.990000e+00 : f32
      %350 = vector.broadcast %cst_104 : f32 to vector<16x128xf32>
      %351 = arith.mulf %350, %349 : vector<16x128xf32>
      %352 = arith.addf %314, %351 : vector<16x128xf32>
      %c9_i32 = arith.constant 9 : i32
      %353 = vector.extract_strided_slice %352 {offsets = [0, 127], sizes = [16, 1], strides = [1, 1]} : vector<16x128xf32> to vector<16x1xf32>
      %354 = vector.extract_strided_slice %352 {offsets = [0, 0], sizes = [16, 127], strides = [1, 1]} : vector<16x128xf32> to vector<16x127xf32>
      %355 = tpu.concatenate %353, %354 in 1 : vector<16x1xf32>, vector<16x127xf32> -> vector<16x128xf32>
      %cst_105 = arith.constant 0.000000e+00 : f32
      %356 = vector.broadcast %cst_105 : f32 to vector<16x128xf32>
      %357 = arith.select %5, %355, %356 : vector<16x128xi1>, vector<16x128xf32>
      %cst_106 = arith.constant 0.000000e+00 : f32
      %358 = vector.broadcast %cst_106 : f32 to vector<16x128xf32>
      %359 = arith.select %3, %352, %358 : vector<16x128xi1>, vector<16x128xf32>
      %360 = arith.subf %357, %359 : vector<16x128xf32>
      %cst_107 = arith.constant 0.00999999977 : f32
      %361 = vector.broadcast %cst_107 : f32 to vector<16x128xf32>
      %362 = arith.mulf %361, %360 : vector<16x128xf32>
      %363 = arith.subf %348, %362 : vector<16x128xf32>
      %364 = arith.addf %363, %7 : vector<16x128xf32>
      %cst_108 = arith.constant 9.900990e-01 : f32
      %365 = vector.broadcast %cst_108 : f32 to vector<16x128xf32>
      %366 = arith.mulf %364, %365 : vector<16x128xf32>
      %cst_109 = arith.constant 2.000000e+00 : f32
      %367 = vector.broadcast %cst_109 : f32 to vector<16x128xf32>
      %368 = arith.mulf %367, %366 : vector<16x128xf32>
      %369 = arith.subf %368, %348 : vector<16x128xf32>
      %370 = vector.extract_strided_slice %369 {offsets = [0, 1], sizes = [16, 127], strides = [1, 1]} : vector<16x128xf32> to vector<16x127xf32>
      %371 = vector.extract_strided_slice %369 {offsets = [0, 0], sizes = [16, 1], strides = [1, 1]} : vector<16x128xf32> to vector<16x1xf32>
      %372 = tpu.concatenate %370, %371 in 1 : vector<16x127xf32>, vector<16x1xf32> -> vector<16x128xf32>
      %373 = arith.subf %372, %369 : vector<16x128xf32>
      %cst_110 = arith.constant 0.000000e+00 : f32
      %374 = vector.broadcast %cst_110 : f32 to vector<16x128xf32>
      %375 = arith.select %3, %373, %374 : vector<16x128xi1>, vector<16x128xf32>
      %cst_111 = arith.constant 1.250000e+01 : f32
      %376 = vector.broadcast %cst_111 : f32 to vector<16x128xf32>
      %377 = arith.mulf %376, %375 : vector<16x128xf32>
      %378 = arith.addf %352, %377 : vector<16x128xf32>
      %cst_112 = arith.constant -0.0707106814 : f32
      %cst_113 = arith.constant 0.0707106814 : f32
      %379 = vector.broadcast %cst_112 : f32 to vector<16x128xf32>
      %380 = arith.maximumf %379, %378 : vector<16x128xf32>
      %381 = vector.broadcast %cst_113 : f32 to vector<16x128xf32>
      %382 = arith.minimumf %381, %380 : vector<16x128xf32>
      %383 = arith.subf %366, %348 : vector<16x128xf32>
      %cst_114 = arith.constant 1.990000e+00 : f32
      %384 = vector.broadcast %cst_114 : f32 to vector<16x128xf32>
      %385 = arith.mulf %384, %383 : vector<16x128xf32>
      %386 = arith.addf %348, %385 : vector<16x128xf32>
      %387 = arith.subf %382, %352 : vector<16x128xf32>
      %cst_115 = arith.constant 1.990000e+00 : f32
      %388 = vector.broadcast %cst_115 : f32 to vector<16x128xf32>
      %389 = arith.mulf %388, %387 : vector<16x128xf32>
      %390 = arith.addf %352, %389 : vector<16x128xf32>
      %391 = arith.subf %348, %386 : vector<16x128xf32>
      %392 = arith.mulf %391, %391 : vector<16x128xf32>
      %393 = vector.shape_cast %392 : vector<16x128xf32> to vector<1x16x128xf32>
      %cst_116 = arith.constant dense<0.000000e+00> : vector<1xf32>
      %394 = vector.multi_reduction <add>, %393, %cst_116 [1, 2] : vector<1x16x128xf32> to vector<1xf32>
      %395 = vector.shape_cast %394 : vector<1xf32> to vector<1x1x1xf32>
      %396 = vector.extract %395[0, 0, 0] : f32 from vector<1x1x1xf32>
      %cst_117 = arith.constant 9.99999996E-13 : f32
      %397 = vector.broadcast %cst_117 : f32 to vector<16x128xf32>
      %398 = arith.addf %386, %397 : vector<16x128xf32>
      %399 = arith.mulf %398, %398 : vector<16x128xf32>
      %400 = vector.shape_cast %399 : vector<16x128xf32> to vector<1x16x128xf32>
      %cst_118 = arith.constant dense<0.000000e+00> : vector<1xf32>
      %401 = vector.multi_reduction <add>, %400, %cst_118 [1, 2] : vector<1x16x128xf32> to vector<1xf32>
      %402 = vector.shape_cast %401 : vector<1xf32> to vector<1x1x1xf32>
      %403 = vector.extract %402[0, 0, 0] : f32 from vector<1x1x1xf32>
      %cst_119 = arith.constant 1.000000e-10 : f32
      %404 = arith.mulf %cst_119, %403 : f32
      %405 = arith.cmpf oge, %396, %404 : f32
      %c10_i32 = arith.constant 10 : i32
      %406 = arith.addi %arg2, %c10_i32 : i32
      scf.yield %406, %386, %390, %405 : i32, vector<16x128xf32>, vector<16x128xf32>, i1
    }
    %c0_2 = arith.constant 0 : index
    %c0_3 = arith.constant 0 : index
    %10 = vector.load %arg1[%c0_2, %c0_3] : memref<16x128xf32, #tpu.memory_space<vmem>>, vector<16x128xf32>
    tpu.vector_store %arg1[%c0_2, %c0_3], %9#1 {strides = array<i32>} : memref<16x128xf32, #tpu.memory_space<vmem>>, vector<16x128xf32>,
    return
  }
}

</mosaic_0001>

<llo_original>
// kernel: tv_denoise.1
$region0: #{tv_denoise.1}
  #allocation0 [shape = 'u32[]', space=smem, size = 0x4, offset = 0x4, fixed_abs, tag = 'smem constant byte address 0x4 - core index']
  #allocation1 [shape = 'u32[144,128]{1,0:T(1,128)}', space=vmem, size = 0x12000, scoped, tag = 'internal scratch']
  %s0 = inlined_call_operand.vmem [shape: f32[16,128], index: 0, kind: input, shape index: {}]
  %s1 = inlined_call_operand.vmem [shape: f32[16,128], index: 1, kind: output, shape index: {}]
  %s2 = sld [smem:[#allocation0]]
  $region21: #{tv_denoise.1} parent=0
    _
  %s4 = ssub.s32 1, %s2
  %s5 = scalar_select 0, %s4, %s2
  // Predicated region
  $region2: #{tv_denoise.1} parent=0 // pred_check
    _
  $region3: #{tv_denoise.1} parent=0 // pred_check_branch
    %7 = sbr.rel (0) target = $region5
  $region4: #{tv_denoise.1} parent=0 // pred_region
    _
  $region5: #{tv_denoise.1} parent=0 // pred_fallthru
    _
  %v8 = vld [vmem:[%s0] sm:$0xff]
  %v9 = vld [vmem:[%s0 + $0x8] sm:$0xff]
  %v10 = vlaneseq
  %v11 = vand.u32 %v10, 127
  %vm12 = vcmp.lt.s32.totalorder %v11, 127
  %vm13 = vcmp.ge.s32.totalorder %v11, 1
  %v14 = vmul.f32 %v8, 0.01
  %v15 = vmul.f32 %v9, 0.01
  // While loop
  $region6: #{tv_denoise.1} parent=0 // loop_pre_header
    _
  $region7: #{tv_denoise.1} parent=0 // loop_header
    %s17 = sphi 0, %s638
    %v18 = vphi %v8, %v600
    %v19 = vphi %v9, %v601
    %v20 = vphi 0.0, %v606
    %v21 = vphi 0.0, %v607
    %p22 = pphi 1, %p637
    %p23 = scmp.lt.s32.totalorder %s17, 100
    %p24 = pnand %p23, %p22
    %p25 = pneg %p24
  $region8: #{tv_denoise.1} parent=0 // loop_header_branch
    %27 = sbr.rel (%p24) target = $region12
  $region9: #{tv_denoise.1} parent=0 // loop_body
    %30 = vrot.lane.b32.xlu0 %v20, 1
    %v31 = vpop.permute.xlu0 %30
    %32 = vrot.lane.b32.xlu0 %v21, 1
    %v33 = vpop.permute.xlu0 %32
    %v36 = vsel %vm13, %v31, 0.0
    %v37 = vsel %vm13, %v33, 0.0
    %v38 = vsel %vm12, %v20, 0.0
    %v39 = vsel %vm12, %v21, 0.0
    %v40 = vsub.f32 %v36, %v38
    %v41 = vsub.f32 %v37, %v39
    %v42 = vmul.f32 %v40, 0.01
    %v43 = vmul.f32 %v41, 0.01
    %v44 = vsub.f32 %v18, %v42
    %v45 = vsub.f32 %v19, %v43
    %v46 = vadd.f32 %v44, %v14
    %v47 = vadd.f32 %v45, %v15
    %v48 = vmul.f32 %v46, 0.990099
    %v49 = vmul.f32 %v47, 0.990099
    %v50 = vmul.f32 %v48, 2.0
    %v51 = vmul.f32 %v49, 2.0
    %v52 = vsub.f32 %v50, %v18
    %v53 = vsub.f32 %v51, %v19
    %56 = vrot.lane.b32.xlu0 %v52, 127
    %v57 = vpop.permute.xlu0 %56
    %58 = vrot.lane.b32.xlu0 %v53, 127
    %v59 = vpop.permute.xlu0 %58
    %v62 = vsub.f32 %v57, %v52
    %v63 = vsub.f32 %v59, %v53
    %v64 = vsel %vm12, %v62, 0.0
    %v65 = vsel %vm12, %v63, 0.0
    %v66 = vmul.f32 %v64, 12.5
    %v67 = vmul.f32 %v65, 12.5
    %v68 = vadd.f32 %v20, %v66
    %v69 = vadd.f32 %v21, %v67
    %v70 = vmax.f32 %v68, -0.07071068
    %v71 = vmax.f32 %v69, -0.07071068
    %v72 = vmin.f32 %v70, 0.07071068
    %v73 = vmin.f32 %v71, 0.07071068
    %v74 = vsub.f32 %v48, %v18
    %v75 = vsub.f32 %v49, %v19
    %v76 = vmul.f32 %v74, 1.99
    %v77 = vmul.f32 %v75, 1.99
    %v78 = vadd.f32 %v18, %v76
    %v79 = vadd.f32 %v19, %v77
    %v80 = vsub.f32 %v72, %v20
    %v81 = vsub.f32 %v73, %v21
    %v82 = vmul.f32 %v80, 1.99
    %v83 = vmul.f32 %v81, 1.99
    %v84 = vadd.f32 %v20, %v82
    %v85 = vadd.f32 %v21, %v83
    %88 = vrot.lane.b32.xlu0 %v84, 1
    %v89 = vpop.permute.xlu0 %88
    %90 = vrot.lane.b32.xlu0 %v85, 1
    %v91 = vpop.permute.xlu0 %90
    %v94 = vsel %vm13, %v89, 0.0
    %v95 = vsel %vm13, %v91, 0.0
    %v96 = vsel %vm12, %v84, 0.0
    %v97 = vsel %vm12, %v85, 0.0
    %v98 = vsub.f32 %v94, %v96
    %v99 = vsub.f32 %v95, %v97
    %v100 = vmul.f32 %v98, 0.01
    %v101 = vmul.f32 %v99, 0.01
    %v102 = vsub.f32 %v78, %v100
    %v103 = vsub.f32 %v79, %v101
    %v104 = vadd.f32 %v102, %v14
    %v105 = vadd.f32 %v103, %v15
    %v106 = vmul.f32 %v104, 0.990099
    %v107 = vmul.f32 %v105, 0.990099
    %v108 = vmul.f32 %v106, 2.0
    %v109 = vmul.f32 %v107, 2.0
    %v110 = vsub.f32 %v108, %v78
    %v111 = vsub.f32 %v109, %v79
    %114 = vrot.lane.b32.xlu0 %v110, 127
    %v115 = vpop.permute.xlu0 %114
    %116 = vrot.lane.b32.xlu0 %v111, 127
    %v117 = vpop.permute.xlu0 %116
    %v120 = vsub.f32 %v115, %v110
    %v121 = vsub.f32 %v117, %v111
    %v122 = vsel %vm12, %v120, 0.0
    %v123 = vsel %vm12, %v121, 0.0
    %v124 = vmul.f32 %v122, 12.5
    %v125 = vmul.f32 %v123, 12.5
    %v126 = vadd.f32 %v84, %v124
    %v127 = vadd.f32 %v85, %v125
    %v128 = vmax.f32 %v126, -0.07071068
    %v129 = vmax.f32 %v127, -0.07071068
    %v130 = vmin.f32 %v128, 0.07071068
    %v131 = vmin.f32 %v129, 0.07071068
    %v132 = vsub.f32 %v106, %v78
    %v133 = vsub.f32 %v107, %v79
    %v134 = vmul.f32 %v132, 1.99
    %v135 = vmul.f32 %v133, 1.99
    %v136 = vadd.f32 %v78, %v134
    %v137 = vadd.f32 %v79, %v135
    %v138 = vsub.f32 %v130, %v84
    %v139 = vsub.f32 %v131, %v85
    %v140 = vmul.f32 %v138, 1.99
    %v141 = vmul.f32 %v139, 1.99
    %v142 = vadd.f32 %v84, %v140
    %v143 = vadd.f32 %v85, %v141
    %146 = vrot.lane.b32.xlu0 %v142, 1
    %v147 = vpop.permute.xlu0 %146
    %148 = vrot.lane.b32.xlu0 %v143, 1
    %v149 = vpop.permute.xlu0 %148
    %v152 = vsel %vm13, %v147, 0.0
    %v153 = vsel %vm13, %v149, 0.0
    %v154 = vsel %vm12, %v142, 0.0
    %v155 = vsel %vm12, %v143, 0.0
    %v156 = vsub.f32 %v152, %v154
    %v157 = vsub.f32 %v153, %v155
    %v158 = vmul.f32 %v156, 0.01
    %v159 = vmul.f32 %v157, 0.01
    %v160 = vsub.f32 %v136, %v158
    %v161 = vsub.f32 %v137, %v159
    %v162 = vadd.f32 %v160, %v14
    %v163 = vadd.f32 %v161, %v15
    %v164 = vmul.f32 %v162, 0.990099
    %v165 = vmul.f32 %v163, 0.990099
    %v166 = vmul.f32 %v164, 2.0
    %v167 = vmul.f32 %v165, 2.0
    %v168 = vsub.f32 %v166, %v136
    %v169 = vsub.f32 %v167, %v137
    %172 = vrot.lane.b32.xlu0 %v168, 127
    %v173 = vpop.permute.xlu0 %172
    %174 = vrot.lane.b32.xlu0 %v169, 127
    %v175 = vpop.permute.xlu0 %174
    %v178 = vsub.f32 %v173, %v168
    %v179 = vsub.f32 %v175, %v169
    %v180 = vsel %vm12, %v178, 0.0
    %v181 = vsel %vm12, %v179, 0.0
    %v182 = vmul.f32 %v180, 12.5
    %v183 = vmul.f32 %v181, 12.5
    %v184 = vadd.f32 %v142, %v182
    %v185 = vadd.f32 %v143, %v183
    %v186 = vmax.f32 %v184, -0.07071068
    %v187 = vmax.f32 %v185, -0.07071068
    %v188 = vmin.f32 %v186, 0.07071068
    %v189 = vmin.f32 %v187, 0.07071068
    %v190 = vsub.f32 %v164, %v136
    %v191 = vsub.f32 %v165, %v137
    %v192 = vmul.f32 %v190, 1.99
    %v193 = vmul.f32 %v191, 1.99
    %v194 = vadd.f32 %v136, %v192
    %v195 = vadd.f32 %v137, %v193
    %v196 = vsub.f32 %v188, %v142
    %v197 = vsub.f32 %v189, %v143
    %v198 = vmul.f32 %v196, 1.99
    %v199 = vmul.f32 %v197, 1.99
    %v200 = vadd.f32 %v142, %v198
    %v201 = vadd.f32 %v143, %v199
    %204 = vrot.lane.b32.xlu0 %v200, 1
    %v205 = vpop.permute.xlu0 %204
    %206 = vrot.lane.b32.xlu0 %v201, 1
    %v207 = vpop.permute.xlu0 %206
    %v210 = vsel %vm13, %v205, 0.0
    %v211 = vsel %vm13, %v207, 0.0
    %v212 = vsel %vm12, %v200, 0.0
    %v213 = vsel %vm12, %v201, 0.0
    %v214 = vsub.f32 %v210, %v212
    %v215 = vsub.f32 %v211, %v213
    %v216 = vmul.f32 %v214, 0.01
    %v217 = vmul.f32 %v215, 0.01
    %v218 = vsub.f32 %v194, %v216
    %v219 = vsub.f32 %v195, %v217
    %v220 = vadd.f32 %v218, %v14
    %v221 = vadd.f32 %v219, %v15
    %v222 = vmul.f32 %v220, 0.990099
    %v223 = vmul.f32 %v221, 0.990099
    %v224 = vmul.f32 %v222, 2.0
    %v225 = vmul.f32 %v223, 2.0
    %v226 = vsub.f32 %v224, %v194
    %v227 = vsub.f32 %v225, %v195
    %230 = vrot.lane.b32.xlu0 %v226, 127
    %v231 = vpop.permute.xlu0 %230
    %232 = vrot.lane.b32.xlu0 %v227, 127
    %v233 = vpop.permute.xlu0 %232
    %v236 = vsub.f32 %v231, %v226
    %v237 = vsub.f32 %v233, %v227
    %v238 = vsel %vm12, %v236, 0.0
    %v239 = vsel %vm12, %v237, 0.0
    %v240 = vmul.f32 %v238, 12.5
    %v241 = vmul.f32 %v239, 12.5
    %v242 = vadd.f32 %v200, %v240
    %v243 = vadd.f32 %v201, %v241
    %v244 = vmax.f32 %v242, -0.07071068
    %v245 = vmax.f32 %v243, -0.07071068
    %v246 = vmin.f32 %v244, 0.07071068
    %v247 = vmin.f32 %v245, 0.07071068
    %v248 = vsub.f32 %v222, %v194
    %v249 = vsub.f32 %v223, %v195
    %v250 = vmul.f32 %v248, 1.99
    %v251 = vmul.f32 %v249, 1.99
    %v252 = vadd.f32 %v194, %v250
    %v253 = vadd.f32 %v195, %v251
    %v254 = vsub.f32 %v246, %v200
    %v255 = vsub.f32 %v247, %v201
    %v256 = vmul.f32 %v254, 1.99
    %v257 = vmul.f32 %v255, 1.99
    %v258 = vadd.f32 %v200, %v256
    %v259 = vadd.f32 %v201, %v257
    %262 = vrot.lane.b32.xlu0 %v258, 1
    %v263 = vpop.permute.xlu0 %262
    %264 = vrot.lane.b32.xlu0 %v259, 1
    %v265 = vpop.permute.xlu0 %264
    %v268 = vsel %vm13, %v263, 0.0
    %v269 = vsel %vm13, %v265, 0.0
    %v270 = vsel %vm12, %v258, 0.0
    %v271 = vsel %vm12, %v259, 0.0
    %v272 = vsub.f32 %v268, %v270
    %v273 = vsub.f32 %v269, %v271
    %v274 = vmul.f32 %v272, 0.01
    %v275 = vmul.f32 %v273, 0.01
    %v276 = vsub.f32 %v252, %v274
    %v277 = vsub.f32 %v253, %v275
    %v278 = vadd.f32 %v276, %v14
    %v279 = vadd.f32 %v277, %v15
    %v280 = vmul.f32 %v278, 0.990099
    %v281 = vmul.f32 %v279, 0.990099
    %v282 = vmul.f32 %v280, 2.0
    %v283 = vmul.f32 %v281, 2.0
    %v284 = vsub.f32 %v282, %v252
    %v285 = vsub.f32 %v283, %v253
    %288 = vrot.lane.b32.xlu0 %v284, 127
    %v289 = vpop.permute.xlu0 %288
    %290 = vrot.lane.b32.xlu0 %v285, 127
    %v291 = vpop.permute.xlu0 %290
    %v294 = vsub.f32 %v289, %v284
    %v295 = vsub.f32 %v291, %v285
    %v296 = vsel %vm12, %v294, 0.0
    %v297 = vsel %vm12, %v295, 0.0
    %v298 = vmul.f32 %v296, 12.5
    %v299 = vmul.f32 %v297, 12.5
    %v300 = vadd.f32 %v258, %v298
    %v301 = vadd.f32 %v259, %v299
    %v302 = vmax.f32 %v300, -0.07071068
    %v303 = vmax.f32 %v301, -0.07071068
    %v304 = vmin.f32 %v302, 0.07071068
    %v305 = vmin.f32 %v303, 0.07071068
    %v306 = vsub.f32 %v280, %v252
    %v307 = vsub.f32 %v281, %v253
    %v308 = vmul.f32 %v306, 1.99
    %v309 = vmul.f32 %v307, 1.99
    %v310 = vadd.f32 %v252, %v308
    %v311 = vadd.f32 %v253, %v309
    %v312 = vsub.f32 %v304, %v258
    %v313 = vsub.f32 %v305, %v259
    %v314 = vmul.f32 %v312, 1.99
    %v315 = vmul.f32 %v313, 1.99
    %v316 = vadd.f32 %v258, %v314
    %v317 = vadd.f32 %v259, %v315
    %320 = vrot.lane.b32.xlu0 %v316, 1
    %v321 = vpop.permute.xlu0 %320
    %322 = vrot.lane.b32.xlu0 %v317, 1
    %v323 = vpop.permute.xlu0 %322
    %v326 = vsel %vm13, %v321, 0.0
    %v327 = vsel %vm13, %v323, 0.0
    %v328 = vsel %vm12, %v316, 0.0
    %v329 = vsel %vm12, %v317, 0.0
    %v330 = vsub.f32 %v326, %v328
    %v331 = vsub.f32 %v327, %v329
    %v332 = vmul.f32 %v330, 0.01
    %v333 = vmul.f32 %v331, 0.01
    %v334 = vsub.f32 %v310, %v332
    %v335 = vsub.f32 %v311, %v333
    %v336 = vadd.f32 %v334, %v14
    %v337 = vadd.f32 %v335, %v15
    %v338 = vmul.f32 %v336, 0.990099
    %v339 = vmul.f32 %v337, 0.990099
    %v340 = vmul.f32 %v338, 2.0
    %v341 = vmul.f32 %v339, 2.0
    %v342 = vsub.f32 %v340, %v310
    %v343 = vsub.f32 %v341, %v311
    %346 = vrot.lane.b32.xlu0 %v342, 127
    %v347 = vpop.permute.xlu0 %346
    %348 = vrot.lane.b32.xlu0 %v343, 127
    %v349 = vpop.permute.xlu0 %348
    %v352 = vsub.f32 %v347, %v342
    %v353 = vsub.f32 %v349, %v343
    %v354 = vsel %vm12, %v352, 0.0
    %v355 = vsel %vm12, %v353, 0.0
    %v356 = vmul.f32 %v354, 12.5
    %v357 = vmul.f32 %v355, 12.5
    %v358 = vadd.f32 %v316, %v356
    %v359 = vadd.f32 %v317, %v357
    %v360 = vmax.f32 %v358, -0.07071068
    %v361 = vmax.f32 %v359, -0.07071068
    %v362 = vmin.f32 %v360, 0.07071068
    %v363 = vmin.f32 %v361, 0.07071068
    %v364 = vsub.f32 %v338, %v310
    %v365 = vsub.f32 %v339, %v311
    %v366 = vmul.f32 %v364, 1.99
    %v367 = vmul.f32 %v365, 1.99
    %v368 = vadd.f32 %v310, %v366
    %v369 = vadd.f32 %v311, %v367
    %v370 = vsub.f32 %v362, %v316
    %v371 = vsub.f32 %v363, %v317
    %v372 = vmul.f32 %v370, 1.99
    %v373 = vmul.f32 %v371, 1.99
    %v374 = vadd.f32 %v316, %v372
    %v375 = vadd.f32 %v317, %v373
    %378 = vrot.lane.b32.xlu0 %v374, 1
    %v379 = vpop.permute.xlu0 %378
    %380 = vrot.lane.b32.xlu0 %v375, 1
    %v381 = vpop.permute.xlu0 %380
    %v384 = vsel %vm13, %v379, 0.0
    %v385 = vsel %vm13, %v381, 0.0
    %v386 = vsel %vm12, %v374, 0.0
    %v387 = vsel %vm12, %v375, 0.0
    %v388 = vsub.f32 %v384, %v386
    %v389 = vsub.f32 %v385, %v387
    %v390 = vmul.f32 %v388, 0.01
    %v391 = vmul.f32 %v389, 0.01
    %v392 = vsub.f32 %v368, %v390
    %v393 = vsub.f32 %v369, %v391
    %v394 = vadd.f32 %v392, %v14
    %v395 = vadd.f32 %v393, %v15
    %v396 = vmul.f32 %v394, 0.990099
    %v397 = vmul.f32 %v395, 0.990099
    %v398 = vmul.f32 %v396, 2.0
    %v399 = vmul.f32 %v397, 2.0
    %v400 = vsub.f32 %v398, %v368
    %v401 = vsub.f32 %v399, %v369
    %404 = vrot.lane.b32.xlu0 %v400, 127
    %v405 = vpop.permute.xlu0 %404
    %406 = vrot.lane.b32.xlu0 %v401, 127
    %v407 = vpop.permute.xlu0 %406
    %v410 = vsub.f32 %v405, %v400
    %v411 = vsub.f32 %v407, %v401
    %v412 = vsel %vm12, %v410, 0.0
    %v413 = vsel %vm12, %v411, 0.0
    %v414 = vmul.f32 %v412, 12.5
    %v415 = vmul.f32 %v413, 12.5
    %v416 = vadd.f32 %v374, %v414
    %v417 = vadd.f32 %v375, %v415
    %v418 = vmax.f32 %v416, -0.07071068
    %v419 = vmax.f32 %v417, -0.07071068
    %v420 = vmin.f32 %v418, 0.07071068
    %v421 = vmin.f32 %v419, 0.07071068
    %v422 = vsub.f32 %v396, %v368
    %v423 = vsub.f32 %v397, %v369
    %v424 = vmul.f32 %v422, 1.99
    %v425 = vmul.f32 %v423, 1.99
    %v426 = vadd.f32 %v368, %v424
    %v427 = vadd.f32 %v369, %v425
    %v428 = vsub.f32 %v420, %v374
    %v429 = vsub.f32 %v421, %v375
    %v430 = vmul.f32 %v428, 1.99
    %v431 = vmul.f32 %v429, 1.99
    %v432 = vadd.f32 %v374, %v430
    %v433 = vadd.f32 %v375, %v431
    %436 = vrot.lane.b32.xlu0 %v432, 1
    %v437 = vpop.permute.xlu0 %436
    %438 = vrot.lane.b32.xlu0 %v433, 1
    %v439 = vpop.permute.xlu0 %438
    %v442 = vsel %vm13, %v437, 0.0
    %v443 = vsel %vm13, %v439, 0.0
    %v444 = vsel %vm12, %v432, 0.0
    %v445 = vsel %vm12, %v433, 0.0
    %v446 = vsub.f32 %v442, %v444
    %v447 = vsub.f32 %v443, %v445
    %v448 = vmul.f32 %v446, 0.01
    %v449 = vmul.f32 %v447, 0.01
    %v450 = vsub.f32 %v426, %v448
    %v451 = vsub.f32 %v427, %v449
    %v452 = vadd.f32 %v450, %v14
    %v453 = vadd.f32 %v451, %v15
    %v454 = vmul.f32 %v452, 0.990099
    %v455 = vmul.f32 %v453, 0.990099
    %v456 = vmul.f32 %v454, 2.0
    %v457 = vmul.f32 %v455, 2.0
    %v458 = vsub.f32 %v456, %v426
    %v459 = vsub.f32 %v457, %v427
    %462 = vrot.lane.b32.xlu0 %v458, 127
    %v463 = vpop.permute.xlu0 %462
    %464 = vrot.lane.b32.xlu0 %v459, 127
    %v465 = vpop.permute.xlu0 %464
    %v468 = vsub.f32 %v463, %v458
    %v469 = vsub.f32 %v465, %v459
    %v470 = vsel %vm12, %v468, 0.0
    %v471 = vsel %vm12, %v469, 0.0
    %v472 = vmul.f32 %v470, 12.5
    %v473 = vmul.f32 %v471, 12.5
    %v474 = vadd.f32 %v432, %v472
    %v475 = vadd.f32 %v433, %v473
    %v476 = vmax.f32 %v474, -0.07071068
    %v477 = vmax.f32 %v475, -0.07071068
    %v478 = vmin.f32 %v476, 0.07071068
    %v479 = vmin.f32 %v477, 0.07071068
    %v480 = vsub.f32 %v454, %v426
    %v481 = vsub.f32 %v455, %v427
    %v482 = vmul.f32 %v480, 1.99
    %v483 = vmul.f32 %v481, 1.99
    %v484 = vadd.f32 %v426, %v482
    %v485 = vadd.f32 %v427, %v483
    %v486 = vsub.f32 %v478, %v432
    %v487 = vsub.f32 %v479, %v433
    %v488 = vmul.f32 %v486, 1.99
    %v489 = vmul.f32 %v487, 1.99
    %v490 = vadd.f32 %v432, %v488
    %v491 = vadd.f32 %v433, %v489
    %494 = vrot.lane.b32.xlu0 %v490, 1
    %v495 = vpop.permute.xlu0 %494
    %496 = vrot.lane.b32.xlu0 %v491, 1
    %v497 = vpop.permute.xlu0 %496
    %v500 = vsel %vm13, %v495, 0.0
    %v501 = vsel %vm13, %v497, 0.0
    %v502 = vsel %vm12, %v490, 0.0
    %v503 = vsel %vm12, %v491, 0.0
    %v504 = vsub.f32 %v500, %v502
    %v505 = vsub.f32 %v501, %v503
    %v506 = vmul.f32 %v504, 0.01
    %v507 = vmul.f32 %v505, 0.01
    %v508 = vsub.f32 %v484, %v506
    %v509 = vsub.f32 %v485, %v507
    %v510 = vadd.f32 %v508, %v14
    %v511 = vadd.f32 %v509, %v15
    %v512 = vmul.f32 %v510, 0.990099
    %v513 = vmul.f32 %v511, 0.990099
    %v514 = vmul.f32 %v512, 2.0
    %v515 = vmul.f32 %v513, 2.0
    %v516 = vsub.f32 %v514, %v484
    %v517 = vsub.f32 %v515, %v485
    %520 = vrot.lane.b32.xlu0 %v516, 127
    %v521 = vpop.permute.xlu0 %520
    %522 = vrot.lane.b32.xlu0 %v517, 127
    %v523 = vpop.permute.xlu0 %522
    %v526 = vsub.f32 %v521, %v516
    %v527 = vsub.f32 %v523, %v517
    %v528 = vsel %vm12, %v526, 0.0
    %v529 = vsel %vm12, %v527, 0.0
    %v530 = vmul.f32 %v528, 12.5
    %v531 = vmul.f32 %v529, 12.5
    %v532 = vadd.f32 %v490, %v530
    %v533 = vadd.f32 %v491, %v531
    %v534 = vmax.f32 %v532, -0.07071068
    %v535 = vmax.f32 %v533, -0.07071068
    %v536 = vmin.f32 %v534, 0.07071068
    %v537 = vmin.f32 %v535, 0.07071068
    %v538 = vsub.f32 %v512, %v484
    %v539 = vsub.f32 %v513, %v485
    %v540 = vmul.f32 %v538, 1.99
    %v541 = vmul.f32 %v539, 1.99
    %v542 = vadd.f32 %v484, %v540
    %v543 = vadd.f32 %v485, %v541
    %v544 = vsub.f32 %v536, %v490
    %v545 = vsub.f32 %v537, %v491
    %v546 = vmul.f32 %v544, 1.99
    %v547 = vmul.f32 %v545, 1.99
    %v548 = vadd.f32 %v490, %v546
    %v549 = vadd.f32 %v491, %v547
    %552 = vrot.lane.b32.xlu0 %v548, 1
    %v553 = vpop.permute.xlu0 %552
    %554 = vrot.lane.b32.xlu0 %v549, 1
    %v555 = vpop.permute.xlu0 %554
    %v558 = vsel %vm13, %v553, 0.0
    %v559 = vsel %vm13, %v555, 0.0
    %v560 = vsel %vm12, %v548, 0.0
    %v561 = vsel %vm12, %v549, 0.0
    %v562 = vsub.f32 %v558, %v560
    %v563 = vsub.f32 %v559, %v561
    %v564 = vmul.f32 %v562, 0.01
    %v565 = vmul.f32 %v563, 0.01
    %v566 = vsub.f32 %v542, %v564
    %v567 = vsub.f32 %v543, %v565
    %v568 = vadd.f32 %v566, %v14
    %v569 = vadd.f32 %v567, %v15
    %v570 = vmul.f32 %v568, 0.990099
    %v571 = vmul.f32 %v569, 0.990099
    %v572 = vmul.f32 %v570, 2.0
    %v573 = vmul.f32 %v571, 2.0
    %v574 = vsub.f32 %v572, %v542
    %v575 = vsub.f32 %v573, %v543
    %578 = vrot.lane.b32.xlu0 %v574, 127
    %v579 = vpop.permute.xlu0 %578
    %580 = vrot.lane.b32.xlu0 %v575, 127
    %v581 = vpop.permute.xlu0 %580
    %v584 = vsub.f32 %v579, %v574
    %v585 = vsub.f32 %v581, %v575
    %v586 = vsel %vm12, %v584, 0.0
    %v587 = vsel %vm12, %v585, 0.0
    %v588 = vmul.f32 %v586, 12.5
    %v589 = vmul.f32 %v587, 12.5
    %v590 = vadd.f32 %v548, %v588
    %v591 = vadd.f32 %v549, %v589
    %v592 = vmax.f32 %v590, -0.07071068
    %v593 = vmax.f32 %v591, -0.07071068
    %v594 = vmin.f32 %v592, 0.07071068
    %v595 = vmin.f32 %v593, 0.07071068
    %v596 = vsub.f32 %v570, %v542
    %v597 = vsub.f32 %v571, %v543
    %v598 = vmul.f32 %v596, 1.99
    %v599 = vmul.f32 %v597, 1.99
    %v600 = vadd.f32 %v542, %v598
    %v601 = vadd.f32 %v543, %v599
    %v602 = vsub.f32 %v594, %v548
    %v603 = vsub.f32 %v595, %v549
    %v604 = vmul.f32 %v602, 1.99
    %v605 = vmul.f32 %v603, 1.99
    %v606 = vadd.f32 %v548, %v604
    %v607 = vadd.f32 %v549, %v605
    %v608 = vsub.f32 %v542, %v600
    %v609 = vsub.f32 %v543, %v601
    %v610 = vmul.f32 %v608, %v608
    %v611 = vmul.f32 %v609, %v609
    %v612 = vadd.f32 %v610, %v611
    %613 = vadd.xlane.f32.xlu0 %v612
    %v614 = vpop.xlane.xlu0 %613
    %v615 = vrot.slane %v614, 4
    %v616 = vadd.f32 %v614, %v615
    %v617 = vrot.slane %v616, 2
    %v618 = vadd.f32 %v616, %v617
    %v619 = vrot.slane %v618, 1
    %v620 = vadd.f32 %v618, %v619
    %s621 = vtos %v620
    %v622 = vadd.f32 %v600, 1e-12
    %v623 = vadd.f32 %v601, 1e-12
    %v624 = vmul.f32 %v622, %v622
    %v625 = vmul.f32 %v623, %v623
    %v626 = vadd.f32 %v624, %v625
    %627 = vadd.xlane.f32.xlu0 %v626
    %v628 = vpop.xlane.xlu0 %627
    %v629 = vrot.slane %v628, 4
    %v630 = vadd.f32 %v628, %v629
    %v631 = vrot.slane %v630, 2
    %v632 = vadd.f32 %v630, %v631
    %v633 = vrot.slane %v632, 1
    %v634 = vadd.f32 %v632, %v633
    %s635 = vtos %v634
    %s636 = smul.f32 %s635, 1e-10
    %p637 = scmp.ge.f32.partialorder %s621, %s636
    %s638 = sadd.s32 %s17, 10
  $region10: #{tv_denoise.1} parent=0 // loop_footer
    _
  $region11: #{tv_denoise.1} parent=0 // loop_footer_branch
    %16 = sbr.rel target = $region7
  $region12: #{tv_denoise.1} parent=0 // loop_exit
    _
  %639 = vst [vmem:[%s1] sm:$0xff] %v18
  %640 = vst [vmem:[%s1 + $0x8] sm:$0xff] %v19
  // Predicated region
  $region13: #{tv_denoise.1} parent=0 // pred_check
    _
  $region14: #{tv_denoise.1} parent=0 // pred_check_branch
    %642 = sbr.rel (0) target = $region16
  $region15: #{tv_denoise.1} parent=0 // pred_region
    _
  $region16: #{tv_denoise.1} parent=0 // pred_fallthru
    _
  // Predicated region
  $region17: #{tv_denoise.1} parent=0 // pred_check
    _
  $region18: #{tv_denoise.1} parent=0 // pred_check_branch
    %644 = sbr.rel (0) target = $region20
  $region19: #{tv_denoise.1} parent=0 // pred_region
    _
  $region20: #{tv_denoise.1} parent=0 // pred_fallthru
    _

</llo_original>
